<compile_context>
chip_gen: v7x
topology: tpu7x:2x2x1
jax: 0.10.0
libtpu: 0.0.40
codegen_flags: <defaults>
</compile_context>

<pallas_src>
import jax
import jax.numpy as jnp
from jax.experimental import pallas as pl
from jax.experimental.pallas import tpu as pltpu


def _conv3x3_im2col_kernel(p_ref, w_ref, b_ref, o_ref):
    # p_ref: (1, 9*Cin, H*W)  im2col patches (one batch element), K on sublanes
    # w_ref: (Cout, 9*Cin)    weight matrix, rows = output channels
    # b_ref: (Cout, 1)        bias
    # o_ref: (1, Cout, H*W)   lane-dense output (last dim = H*W)
    out = jnp.dot(w_ref[...], p_ref[0], preferred_element_type=jnp.float32)
    out = out + b_ref[...]  # broadcast over the lane (H*W) axis
    o_ref[0] = out.astype(o_ref.dtype)


def headnet_forward(x_nchw, weight_oihw, bias):
    """Conv2d(kernel=3, stride=1, padding=1) forward. x_nchw: (N, Cin, H, W)."""
    N, Cin, H, W = x_nchw.shape
    Cout = weight_oihw.shape[0]
    K = 9 * Cin
    M = H * W

    # ---- glue (plain JAX): layout + zero padding + im2col ----
    x_nhwc = jnp.transpose(x_nchw, (0, 2, 3, 1))                # (N,H,W,Cin)
    x_pad = jnp.pad(x_nhwc, ((0, 0), (1, 1), (1, 1), (0, 0)))   # (N,H+2,W+2,Cin)
    taps = [x_pad[:, kh:kh + H, kw:kw + W, :]
            for kh in range(3) for kw in range(3)]               # 9 x (N,H,W,Cin)
    patches = jnp.concatenate(taps, axis=-1).reshape(N, M, K)    # (N, H*W, 9*Cin)
    patches_t = jnp.transpose(patches, (0, 2, 1))                # (N, 9*Cin, H*W)

    # weight: OIHW -> (Cout, kh, kw, Cin) -> (Cout, 9*Cin); matches tap order above
    w_mat = jnp.transpose(weight_oihw, (0, 2, 3, 1)).reshape(Cout, K)
    b2d = bias.reshape(Cout, 1)

    out = pl.pallas_call(
        _conv3x3_im2col_kernel,
        out_shape=jax.ShapeDtypeStruct((N, Cout, M), x_nchw.dtype),
        grid_spec=pltpu.PrefetchScalarGridSpec(
            num_scalar_prefetch=0,
            grid=(N,),
            in_specs=[
                pl.BlockSpec((1, K, M), lambda n: (n, 0, 0)),
                pl.BlockSpec((Cout, K), lambda n: (0, 0)),
                pl.BlockSpec((Cout, 1), lambda n: (0, 0)),
            ],
            out_specs=pl.BlockSpec((1, Cout, M), lambda n: (n, 0, 0)),
        ),
        compiler_params=pltpu.CompilerParams(
            dimension_semantics=("parallel",)
        ),
    )(patches_t, w_mat, b2d)

    return out.reshape(N, Cout, H, W)  # slab is already NCHW-ordered


if __name__ == "__main__":
    # Small config consistent with HeadNet: encoder_channels=4 -> Cin=24.
    encoder_channels = 4
    Cin = 6 * encoder_channels
    Cout = 8
    N, H, W = 2, 16, 16

    key = jax.random.PRNGKey(0)
    kx, kw, kb = jax.random.split(key, 3)

    x = jax.random.normal(kx, (N, Cin, H, W), dtype=jnp.float32)
    # Deterministic parameter init (PyTorch-default-like uniform bound).
    fan_in = Cin * 3 * 3
    bound = 1.0 / (fan_in ** 0.5)
    weight = jax.random.uniform(kw, (Cout, Cin, 3, 3), jnp.float32, -bound, bound)
    bias = jax.random.uniform(kb, (Cout,), jnp.float32, -bound, bound)

    out = headnet_forward(x, weight, bias)
    out = jax.block_until_ready(out)

    # Reference check against XLA conv.
    ref = jax.lax.conv_general_dilated(
        x, weight, window_strides=(1, 1), padding=((1, 1), (1, 1)),
        dimension_numbers=("NCHW", "OIHW", "NCHW"),
    ) + bias[None, :, None, None]
    assert out.shape == (N, Cout, H, W)
    assert jnp.allclose(out, ref, atol=1e-4, rtol=1e-4)

    print("KERNEL_OK")
</pallas_src>

<mosaic_0001>
module attributes {stable_mosaic.version = 11 : i64} {
  func.func @_conv3x3_im2col_kernel(%arg0: i32, %arg1: memref<1x216x256xf32, #tpu.memory_space<vmem>>, %arg2: memref<8x216xf32, #tpu.memory_space<vmem>>, %arg3: memref<8x1xf32, #tpu.memory_space<vmem>>, %arg4: memref<1x8x256xf32, #tpu.memory_space<vmem>>) attributes {dimension_semantics = [#tpu.dimension_semantics<parallel>], iteration_bounds = array<i64: 2>, scalar_prefetch = 0 : i64, scratch_operands = 0 : i64, tpu.core_type = #tpu.core_type<tc>, window_params = [{transform_indices = @transform_0, window_bounds = array<i64: 1, 216, 256>}, {pipeline_mode = #tpu.pipeline_mode<synchronous>, transform_indices = @transform_1, window_bounds = array<i64: 8, 216>}, {pipeline_mode = #tpu.pipeline_mode<synchronous>, transform_indices = @transform_2, window_bounds = array<i64: 8, 1>}, {transform_indices = @transform_3, window_bounds = array<i64: 1, 8, 256>}]} {
    %c0 = arith.constant 0 : index
    %c0_0 = arith.constant 0 : index
    %0 = vector.load %arg2[%c0, %c0_0] : memref<8x216xf32, #tpu.memory_space<vmem>>, vector<8x216xf32>
    %c0_1 = arith.constant 0 : index
    %c0_2 = arith.constant 0 : index
    %c0_3 = arith.constant 0 : index
    %1 = vector.load %arg1[%c0_1, %c0_2, %c0_3] : memref<1x216x256xf32, #tpu.memory_space<vmem>>, vector<1x216x256xf32>
    %2 = vector.shape_cast %1 : vector<1x216x256xf32> to vector<216x256xf32>
    %cst = arith.constant dense<0.000000e+00> : vector<8x256xf32>
    %3 = tpu.matmul %0, %2, %cst {dimension_numbers = #tpu.dot_dimension_numbers<[1], [0], [0], [1], [0, 0, 1, 1], [], []>} : vector<8x216xf32>, vector<216x256xf32>, vector<8x256xf32> -> vector<8x256xf32>
    %c0_4 = arith.constant 0 : index
    %c0_5 = arith.constant 0 : index
    %4 = vector.load %arg3[%c0_4, %c0_5] : memref<8x1xf32, #tpu.memory_space<vmem>>, vector<8x1xf32>
    %5 = vector.broadcast %4 : vector<8x1xf32> to vector<8x256xf32>
    %6 = arith.addf %3, %5 : vector<8x256xf32>
    %c0_6 = arith.constant 0 : index
    %c0_7 = arith.constant 0 : index
    %c0_8 = arith.constant 0 : index
    %7 = vector.load %arg4[%c0_6, %c0_7, %c0_8] : memref<1x8x256xf32, #tpu.memory_space<vmem>>, vector<1x8x256xf32>
    %8 = vector.shape_cast %7 : vector<1x8x256xf32> to vector<8x256xf32>
    %9 = vector.shape_cast %6 : vector<8x256xf32> to vector<1x8x256xf32>
    tpu.vector_store %arg4[%c0_6, %c0_7, %c0_8], %9 {strides = array<i32>} : memref<1x8x256xf32, #tpu.memory_space<vmem>>, vector<1x8x256xf32>,
    return
  }
  func.func @transform_0(%arg0: i32) -> (i32, i32, i32) {
    %c0_i32 = arith.constant 0 : i32
    %c0_i32_0 = arith.constant 0 : i32
    %c0_i32_1 = arith.constant 0 : i32
    return %arg0, %c0_i32, %c0_i32_0 : i32, i32, i32
  }
  func.func @transform_1(%arg0: i32) -> (i32, i32) {
    %c0_i32 = arith.constant 0 : i32
    %c0_i32_0 = arith.constant 0 : i32
    %c0_i32_1 = arith.constant 0 : i32
    return %c0_i32, %c0_i32_0 : i32, i32
  }
  func.func @transform_2(%arg0: i32) -> (i32, i32) {
    %c0_i32 = arith.constant 0 : i32
    %c0_i32_0 = arith.constant 0 : i32
    %c0_i32_1 = arith.constant 0 : i32
    return %c0_i32, %c0_i32_0 : i32, i32
  }
  func.func @transform_3(%arg0: i32) -> (i32, i32, i32) {
    %c0_i32 = arith.constant 0 : i32
    %c0_i32_0 = arith.constant 0 : i32
    %c0_i32_1 = arith.constant 0 : i32
    return %arg0, %c0_i32, %c0_i32_0 : i32, i32, i32
  }
}

</mosaic_0001>

<llo_original>
// kernel: tpu_custom_call.1
$region0: #{tpu_custom_call.1}
  #allocation0 [shape = 'u32[]', space=smem, size = 0x4, offset = 0x4, fixed_abs, tag = 'smem constant byte address 0x4 - core index']
  #allocation1 [shape = 'u32[144,128]{1,0:T(1,128)}', space=vmem, size = 0x12000, scoped, tag = 'internal scratch']
  %s0 = inlined_call_operand.hbm [shape: f32[2,216,256], index: 0, kind: input, shape index: {}]
  %s1 = inlined_call_operand.hbm [shape: f32[8,216], index: 1, kind: input, shape index: {}]
  %s2 = inlined_call_operand.vmem [shape: f32[8,1], index: 2, kind: input, shape index: {}]
  %s3 = inlined_call_operand.hbm [shape: f32[2,8,256], index: 3, kind: output, shape index: {}]
  %s4 = sld [smem:[#allocation0]]
  $region53: #{tpu_custom_call.1} parent=0
    _
  %s6 = ssub.s32 1, %s4
  %s7 = scalar_select 0, %s6, %s4
  $region1: #{tpu_custom_call.1} parent=0
    #allocation2 [shape = 'u8[442368]{0}', space=vmem, size = 0x6c000, scoped, tag = 'input window, operand 0']
    #allocation3 [shape = 's32[2]{0}', space=sflag, size = 0x8, scoped, tag = 'scoped memory for tpu_custom_call.1']
    #allocation4 [shape = 's32[2]{0}', space=sflag, size = 0x8, scoped, tag = 'scoped memory for tpu_custom_call.1']
    #allocation5 [shape = 'u8[8192]{0}', space=vmem, size = 0x2000, scoped, tag = 'input window, operand 1, single buffered']
    #allocation6 [shape = 's32[1]{0}', space=sflag, size = 0x4, scoped, tag = 'scoped memory for tpu_custom_call.1']
    #allocation7 [shape = 'u8[16384]{0}', space=vmem, size = 0x4000, scoped, tag = 'output window, operand 0']
    %8 = vsyncpa [#allocation3], 0
    %s9 = scalar_lea.sflag [#allocation3], 1
    %10 = vsyncpa %s9, 0
    %11 = vsyncpa [#allocation6], 0
    %12 = vsyncpa [#allocation4], 0
    %s13 = scalar_lea.sflag [#allocation4], 1
    %14 = vsyncpa %s13, 0
    loop: start=0, step=1, limit=4
    $region2: #{tpu_custom_call.1} parent=1 // loop_pre_header
      _
    $region3: #{tpu_custom_call.1} parent=1 // loop_header
      %s16 = sphi 0, %s20
      %p17 = scmp.ge.s32.totalorder %s16, 4
      %s26 = sphi 0, %s28
      %s29 = sphi 0, %s26
      %s30 = sphi 0, %s29
      %s46 = sphi 0, %s30
      %s50 = sphi 0, %s50
      %s52 = sphi 0, %s50
      %s53 = sphi 0, %s52
      %s67 = sphi 0, %s53
      %s71 = sphi 0, %s71
      %s73 = sphi 0, %s71
      %s74 = sphi 0, %s73
      %s88 = sphi 0, %s74
      %s94 = sphi 0, %s96
      %s97 = sphi 0, %s94
      %s98 = sphi 0, %s97
      %s114 = sphi 0, %s98
    $region4: #{tpu_custom_call.1} parent=1 // loop_header_branch
      %19 = sbr.rel (%p17) target = $region8
    $region5: #{tpu_custom_call.1} parent=1 // loop_body
      %s21 = ssub.s32 %s16, 1
      %s22 = ssub.s32 %s16, 2
      %s23 = sadd.s32 %s16, 1
      %s24 = ssub.s32 %s16, %s23
      %p25 = scmp.eq.s32.totalorder %s24, 0
      %s27 = sadd.s32 %s26, 1
      %s28 = scalar_select %p25, %s26, %s27
      %p31 = pneg %p25
      %p32 = scmp.eq.s32.totalorder %s16, 1
      %p33 = por %p31, %p32
      %p34 = scmp.ne.s32.totalorder %s26, %s29
      %p35 = scmp.eq.s32.totalorder %s16, 0
      %p36 = por %p34, %p35
      %p37 = scmp.ne.s32.totalorder %s26, %s29
      %p38 = scmp.eq.s32.totalorder %s21, 1
      %p39 = por %p37, %p38
      %p40 = scmp.ne.s32.totalorder %s29, %s30
      %p41 = scmp.eq.s32.totalorder %s21, 0
      %p42 = por %p40, %p41
      %p43 = scmp.ne.s32.totalorder %s29, %s30
      %p44 = scmp.eq.s32.totalorder %s22, 1
      %p45 = por %p43, %p44
      %p47 = scmp.ne.s32.totalorder %s30, %s46
      %p48 = scmp.eq.s32.totalorder %s22, 0
      %p49 = por %p47, %p48
      %s51 = sadd.s32 %s50, 1
      %p54 = scmp.eq.s32.totalorder %s16, 1
      %p55 = scmp.ne.s32.totalorder %s50, %s52
      %p56 = scmp.eq.s32.totalorder %s16, 0
      %p57 = por %p55, %p56
      %p58 = scmp.ne.s32.totalorder %s50, %s52
      %p59 = scmp.eq.s32.totalorder %s21, 1
      %p60 = por %p58, %p59
      %p61 = scmp.ne.s32.totalorder %s52, %s53
      %p62 = scmp.eq.s32.totalorder %s21, 0
      %p63 = por %p61, %p62
      %p64 = scmp.ne.s32.totalorder %s52, %s53
      %p65 = scmp.eq.s32.totalorder %s22, 1
      %p66 = por %p64, %p65
      %p68 = scmp.ne.s32.totalorder %s53, %s67
      %p69 = scmp.eq.s32.totalorder %s22, 0
      %p70 = por %p68, %p69
      %s72 = sadd.s32 %s71, 1
      %p75 = scmp.eq.s32.totalorder %s16, 1
      %p76 = scmp.ne.s32.totalorder %s71, %s73
      %p77 = scmp.eq.s32.totalorder %s16, 0
      %p78 = por %p76, %p77
      %p79 = scmp.ne.s32.totalorder %s71, %s73
      %p80 = scmp.eq.s32.totalorder %s21, 1
      %p81 = por %p79, %p80
      %p82 = scmp.ne.s32.totalorder %s73, %s74
      %p83 = scmp.eq.s32.totalorder %s21, 0
      %p84 = por %p82, %p83
      %p85 = scmp.ne.s32.totalorder %s73, %s74
      %p86 = scmp.eq.s32.totalorder %s22, 1
      %p87 = por %p85, %p86
      %p89 = scmp.ne.s32.totalorder %s74, %s88
      %p90 = scmp.eq.s32.totalorder %s22, 0
      %p91 = por %p89, %p90
      %s92 = ssub.s32 %s16, %s23
      %p93 = scmp.eq.s32.totalorder %s92, 0
      %s95 = sadd.s32 %s94, 1
      %s96 = scalar_select %p93, %s94, %s95
      %p99 = pneg %p93
      %p100 = scmp.eq.s32.totalorder %s16, 1
      %p101 = por %p99, %p100
      %p102 = scmp.ne.s32.totalorder %s94, %s97
      %p103 = scmp.eq.s32.totalorder %s16, 0
      %p104 = por %p102, %p103
      %p105 = scmp.ne.s32.totalorder %s94, %s97
      %p106 = scmp.eq.s32.totalorder %s21, 1
      %p107 = por %p105, %p106
      %p108 = scmp.ne.s32.totalorder %s97, %s98
      %p109 = scmp.eq.s32.totalorder %s21, 0
      %p110 = por %p108, %p109
      %p111 = scmp.ne.s32.totalorder %s97, %s98
      %p112 = scmp.eq.s32.totalorder %s22, 1
      %p113 = por %p111, %p112
      %p115 = scmp.ne.s32.totalorder %s98, %s114
      %p116 = scmp.eq.s32.totalorder %s22, 0
      %p117 = por %p115, %p116
      %p118 = scmp.le.s32.totalorder 1, %s16
      %p119 = scmp.lt.s32.totalorder %s16, 3
      %p120 = pnand %p118, %p119
      %p121 = pneg %p120
      // Predicated region
      $region9: #{tpu_custom_call.1} parent=5 // pred_check
        _
      $region10: #{tpu_custom_call.1} parent=5 // pred_check_branch
        %123 = sbr.rel (%p120) target = $region12
      $region11: #{tpu_custom_call.1} parent=5 // pred_region
        %s124 = ssub.s32 %s16, 1
        // Predicated region
        $region13: #{tpu_custom_call.1} parent=11 // pred_check
          %p125 = pneg %p63
        $region14: #{tpu_custom_call.1} parent=11 // pred_check_branch
          %127 = sbr.rel (%p125) target = $region16
        $region15: #{tpu_custom_call.1} parent=11 // pred_region
          %s129 = ssub.s32 256, 256
          %130 = vsyncadd [#allocation6], %s129
          %s132 = sshll.u32 [#allocation5], 4
          %s133 = int_to_ptr.vmem [resolvable:$true] %s132
          %135 = dma.hbm_to_vmem [thread:$0]  %s1, 256, %s133, [#allocation6]
        $region16: #{tpu_custom_call.1} parent=11 // pred_fallthru
          _
        // Predicated region
        $region17: #{tpu_custom_call.1} parent=11 // pred_check
          %p136 = pneg %p84
        $region18: #{tpu_custom_call.1} parent=11 // pred_check_branch
          %138 = sbr.rel (%p136) target = $region20
        $region19: #{tpu_custom_call.1} parent=11 // pred_region
          _
        $region20: #{tpu_custom_call.1} parent=11 // pred_fallthru
          _
      $region12: #{tpu_custom_call.1} parent=5 // pred_fallthru
        _
      %p139 = scmp.lt.s32.totalorder %s16, 2
      // Predicated region
      $region21: #{tpu_custom_call.1} parent=5 // pred_check
        %p140 = pneg %p139
      $region22: #{tpu_custom_call.1} parent=5 // pred_check_branch
        %142 = sbr.rel (%p140) target = $region24
      $region23: #{tpu_custom_call.1} parent=5 // pred_region
        // Predicated region
        $region25: #{tpu_custom_call.1} parent=23 // pred_check
          %p143 = pneg %p36
        $region26: #{tpu_custom_call.1} parent=23 // pred_check_branch
          %145 = sbr.rel (%p143) target = $region28
        $region27: #{tpu_custom_call.1} parent=23 // pred_region
          %s146 = sand.u32 %s26, 1
          %s147 = scalar_lea.sflag [#allocation3], %s146
          %s148 = sand.u32 %s26, 1
          %s149 = smul.addr %s148, 432
          %s150 = scalar_lea.vmem [#allocation2], %s149
          %s152 = ssub.s32 6912, 6912
          %153 = vsyncadd %s147, %s152
          %s154 = smul.addr %s16, 54
          %s155 = smul.addr %s154, 128
          %s156 = scalar_lea.hbm %s0, %s155
          %s157 = sshll.u32 %s150, 4
          %s158 = int_to_ptr.vmem [resolvable:$true] %s157
          %163 = dma.hbm_to_vmem [thread:$0]  %s156, 6912, %s158, %s147, 256, 256, 16
        $region28: #{tpu_custom_call.1} parent=23 // pred_fallthru
          _
      $region24: #{tpu_custom_call.1} parent=5 // pred_fallthru
        _
      %p164 = scmp.le.s32.totalorder 1, %s16
      %p165 = scmp.lt.s32.totalorder %s16, 3
      %p166 = pnand %p164, %p165
      %p167 = pneg %p166
      // Predicated region
      $region29: #{tpu_custom_call.1} parent=5 // pred_check
        _
      $region30: #{tpu_custom_call.1} parent=5 // pred_check_branch
        %169 = sbr.rel (%p166) target = $region32
      $region31: #{tpu_custom_call.1} parent=5 // pred_region
        %s170 = ssub.s32 %s16, 1
        %s171 = sand.u32 %s29, 1
        %s172 = scalar_lea.sflag [#allocation3], %s171
        %s173 = sand.u32 %s29, 1
        %s174 = smul.addr %s173, 432
        %s175 = scalar_lea.vmem [#allocation2], %s174
        // Predicated region
        $region33: #{tpu_custom_call.1} parent=31 // pred_check
          %p176 = pneg %p42
        $region34: #{tpu_custom_call.1} parent=31 // pred_check_branch
          %178 = sbr.rel (%p176) target = $region36
        $region35: #{tpu_custom_call.1} parent=31 // pred_region
          %179 = dma.done %s172, 6912
        $region36: #{tpu_custom_call.1} parent=31 // pred_fallthru
          _
        // Predicated region
        $region37: #{tpu_custom_call.1} parent=31 // pred_check
          %p180 = pneg %p63
        $region38: #{tpu_custom_call.1} parent=31 // pred_check_branch
          %182 = sbr.rel (%p180) target = $region40
        $region39: #{tpu_custom_call.1} parent=31 // pred_region
          %183 = dma.done [#allocation6], 256
        $region40: #{tpu_custom_call.1} parent=31 // pred_fallthru
          _
        %s184 = sand.u32 %s29, 1
        %s185 = scalar_lea.sflag [#allocation3], %s184
        %s186 = sand.u32 %s29, 1
        %s187 = smul.addr %s186, 432
        %s188 = scalar_lea.vmem [#allocation2], %s187
        %p189 = pneg %p42
        %p190 = pneg %p39
        %p191 = pneg %p63
        %p192 = pneg %p60
        %p193 = pneg %p84
        %p194 = pneg %p81
        %p195 = pneg %p110
        %p196 = pneg %p107
        %s197 = sand.u32 %s97, 1
        %s198 = scalar_lea.sflag [#allocation4], %s197
        %s199 = sand.u32 %s97, 1
        %s200 = smul.addr %s199, 16
        %s201 = scalar_lea.vmem [#allocation7], %s200
        %v202 = vld [vmem:[#allocation5] sm:$0xff]
        %v203 = vld [vmem:[#allocation5 + $0x8] sm:$0xff]
        %v204 = vld [vmem:[%s175] sm:$0xff]
        %v205 = vld [vmem:[%s175 + $0x8] sm:$0xff]
        %v206 = vld [vmem:[%s175 + $0x10] sm:$0xff]
        %v207 = vld [vmem:[%s175 + $0x18] sm:$0xff]
        %v208 = vld [vmem:[%s175 + $0x20] sm:$0xff]
        %v209 = vld [vmem:[%s175 + $0x28] sm:$0xff]
        %v210 = vld [vmem:[%s175 + $0x30] sm:$0xff]
        %v211 = vld [vmem:[%s175 + $0x38] sm:$0xff]
        %v212 = vld [vmem:[%s175 + $0x40] sm:$0xff]
        %v213 = vld [vmem:[%s175 + $0x48] sm:$0xff]
        %v214 = vld [vmem:[%s175 + $0x50] sm:$0xff]
        %v215 = vld [vmem:[%s175 + $0x58] sm:$0xff]
        %v216 = vld [vmem:[%s175 + $0x60] sm:$0xff]
        %v217 = vld [vmem:[%s175 + $0x68] sm:$0xff]
        %v218 = vld [vmem:[%s175 + $0x70] sm:$0xff]
        %v219 = vld [vmem:[%s175 + $0x78] sm:$0xff]
        %v220 = vld [vmem:[%s175 + $0x80] sm:$0xff]
        %v221 = vld [vmem:[%s175 + $0x88] sm:$0xff]
        %v222 = vld [vmem:[%s175 + $0x90] sm:$0xff]
        %v223 = vld [vmem:[%s175 + $0x98] sm:$0xff]
        %v224 = vld [vmem:[%s175 + $0xa0] sm:$0xff]
        %v225 = vld [vmem:[%s175 + $0xa8] sm:$0xff]
        %v226 = vld [vmem:[%s175 + $0xb0] sm:$0xff]
        %v227 = vld [vmem:[%s175 + $0xb8] sm:$0xff]
        %v228 = vld [vmem:[%s175 + $0xc0] sm:$0xff]
        %v229 = vld [vmem:[%s175 + $0xc8] sm:$0xff]
        %v230 = vld [vmem:[%s175 + $0xd0] sm:$0xff]
        %v231 = vld [vmem:[%s175 + $0xd8] sm:$0xff]
        %v232 = vld [vmem:[%s175 + $0xe0] sm:$0xff]
        %v233 = vld [vmem:[%s175 + $0xe8] sm:$0xff]
        %v234 = vld [vmem:[%s175 + $0xf0] sm:$0xff]
        %v235 = vld [vmem:[%s175 + $0xf8] sm:$0xff]
        %v236 = vld [vmem:[%s175 + $0x100] sm:$0xff]
        %v237 = vld [vmem:[%s175 + $0x108] sm:$0xff]
        %v238 = vld [vmem:[%s175 + $0x110] sm:$0xff]
        %v239 = vld [vmem:[%s175 + $0x118] sm:$0xff]
        %v240 = vld [vmem:[%s175 + $0x120] sm:$0xff]
        %v241 = vld [vmem:[%s175 + $0x128] sm:$0xff]
        %v242 = vld [vmem:[%s175 + $0x130] sm:$0xff]
        %v243 = vld [vmem:[%s175 + $0x138] sm:$0xff]
        %v244 = vld [vmem:[%s175 + $0x140] sm:$0xff]
        %v245 = vld [vmem:[%s175 + $0x148] sm:$0xff]
        %v246 = vld [vmem:[%s175 + $0x150] sm:$0xff]
        %v247 = vld [vmem:[%s175 + $0x158] sm:$0xff]
        %v248 = vld [vmem:[%s175 + $0x160] sm:$0xff]
        %v249 = vld [vmem:[%s175 + $0x168] sm:$0xff]
        %v250 = vld [vmem:[%s175 + $0x170] sm:$0xff]
        %v251 = vld [vmem:[%s175 + $0x178] sm:$0xff]
        %v252 = vld [vmem:[%s175 + $0x180] sm:$0xff]
        %v253 = vld [vmem:[%s175 + $0x188] sm:$0xff]
        %v254 = vld [vmem:[%s175 + $0x190] sm:$0xff]
        %v255 = vld [vmem:[%s175 + $0x198] sm:$0xff]
        %v256 = vld [vmem:[%s175 + $0x1a0] sm:$0xff]
        %v257 = vld [vmem:[%s175 + $0x1a8] sm:$0xff]
        %v258 = vld [vmem:[%s2] sm:$0xff]
        %260 = vset.pattern.permute.xlu0 0
        %261 = vperm.xlu0 %260, %v258
        %v262 = vpop.permute.xlu0 %261
        %vm264 = vcmask 719872
        %v266 = vsel %vm264, %v203, 0
        %268 = vmatprep.subr.mxu0 %v205
        %269 = vmatpush1.msra.mxu0 %v204
        %270 = vmatprep.subr.mxu0 %v207
        %271 = vmatpush1.msra.mxu0 %v206
        %272 = vmatprep.subr.mxu0 %v209
        %273 = vmatpush1.msra.mxu0 %v208
        %274 = vmatprep.subr.mxu0 %v211
        %275 = vmatpush1.msra.mxu0 %v210
        %276 = vmatprep.subr.mxu0 %v213
        %277 = vmatpush1.msra.mxu0 %v212
        %278 = vmatprep.subr.mxu0 %v215
        %279 = vmatpush1.msra.mxu0 %v214
        %280 = vmatprep.subr.mxu0 %v217
        %281 = vmatpush1.msra.mxu0 %v216
        %282 = vmatprep.subr.mxu0 %v219
        %283 = vmatpush1.msra.mxu0 %v218
        %284 = vmatprep.subr.mxu0 %v221
        %285 = vmatpush1.msra.mxu0 %v220
        %286 = vmatprep.subr.mxu0 %v223
        %287 = vmatpush1.msra.mxu0 %v222
        %288 = vmatprep.subr.mxu0 %v225
        %289 = vmatpush1.msra.mxu0 %v224
        %290 = vmatprep.subr.mxu0 %v227
        %291 = vmatpush1.msra.mxu0 %v226
        %292 = vmatprep.subr.mxu0 %v229
        %293 = vmatpush1.msra.mxu0 %v228
        %294 = vmatprep.subr.mxu0 %v231
        %295 = vmatpush1.msra.mxu0 %v230
        %296 = vmatprep.subr.mxu0 %v233
        %297 = vmatpush1.msra.mxu0 %v232
        %298 = vmatprep.subr.mxu0 %v235
        %299 = vmatpush1.msra.mxu0 %v234
        %300 = vmatprep.subr.mxu0 %v237
        %301 = vmatpush1.msra.mxu0 %v236
        %302 = vmatprep.subr.mxu0 %v239
        %303 = vmatpush1.msra.mxu0 %v238
        %304 = vmatprep.subr.mxu0 %v241
        %305 = vmatpush1.msra.mxu0 %v240
        %306 = vmatprep.subr.mxu0 %v243
        %307 = vmatpush1.msra.mxu0 %v242
        %308 = vmatprep.subr.mxu0 %v245
        %309 = vmatpush1.msra.mxu0 %v244
        %310 = vmatprep.subr.mxu0 %v247
        %311 = vmatpush1.msra.mxu0 %v246
        %312 = vmatprep.subr.mxu0 %v249
        %313 = vmatpush1.msra.mxu0 %v248
        %314 = vmatprep.subr.mxu0 %v251
        %315 = vmatpush1.msra.mxu0 %v250
        %316 = vmatprep.subr.mxu0 %v253
        %317 = vmatpush1.msra.mxu0 %v252
        %318 = vmatprep.subr.mxu0 %v255
        %319 = vmatpush1.msra.mxu0 %v254
        %320 = vmatprep.subr.mxu0 %v257
        %321 = vmatpush1.msra.mxu0 %v256
        %322 = vmatprep.subr.mxu0 0.0
        %323 = vmatpush1.msra.mxu0 0.0
        %324 = vmatprep.subr.mxu0 0.0
        %325 = vmatpush1.msra.mxu0 0.0
        %326 = vmatprep.subr.mxu0 0.0
        %327 = vmatpush1.msra.mxu0 0.0
        %328 = vmatprep.subr.mxu0 0.0
        %329 = vmatpush1.msra.mxu0 0.0
        %330 = vmatprep.subr.mxu0 0.0
        %331 = vmatpush1.msra.mxu0 0.0
        %332 = vmatprep.mubr.f32.mxu0 %v266
        %333 = vmatmul.mubr.f32.gmra.mrb[0].mxu0 %v202
        %v334 = vpop.f32.mrb[0].mxu0
        %v335 = vadd.f32 %v262, %v334
        %v336 = vpop.f32.mrb[0].mxu0
        %v337 = vadd.f32 %v262, %v336
        %338 = vdwg.mxu0
        %339 = vst [vmem:[%s201] sm:$0xff] %v335
        %340 = vst [vmem:[%s201 + $0x8] sm:$0xff] %v337
        %s341 = sand.u32 %s97, 1
        %s342 = scalar_lea.sflag [#allocation4], %s341
        %s343 = sand.u32 %s97, 1
        %s344 = smul.addr %s343, 16
        %s345 = scalar_lea.vmem [#allocation7], %s344
        // Predicated region
        $region41: #{tpu_custom_call.1} parent=31 // pred_check
          %p346 = pneg %p107
        $region42: #{tpu_custom_call.1} parent=31 // pred_check_branch
          %348 = sbr.rel (%p346) target = $region44
        $region43: #{tpu_custom_call.1} parent=31 // pred_region
          %s350 = ssub.s32 256, 256
          %351 = vsyncadd %s342, %s350
          %s352 = smul.addr %s21, 2
          %s353 = smul.addr %s352, 128
          %s354 = scalar_lea.hbm %s3, %s353
          %s356 = sshll.u32 %s345, 4
          %s357 = int_to_ptr.vmem [resolvable:$true] %s356
          %359 = dma.vmem_to_hbm [thread:$0]  %s357, 256, %s354, %s342
        $region44: #{tpu_custom_call.1} parent=31 // pred_fallthru
          _
      $region32: #{tpu_custom_call.1} parent=5 // pred_fallthru
        _
      %p360 = scmp.le.s32.totalorder 2, %s16
      // Predicated region
      $region45: #{tpu_custom_call.1} parent=5 // pred_check
        %p361 = pneg %p360
      $region46: #{tpu_custom_call.1} parent=5 // pred_check_branch
        %363 = sbr.rel (%p361) target = $region48
      $region47: #{tpu_custom_call.1} parent=5 // pred_region
        %s364 = ssub.s32 %s16, 2
        // Predicated region
        $region49: #{tpu_custom_call.1} parent=47 // pred_check
          %p365 = pneg %p113
        $region50: #{tpu_custom_call.1} parent=47 // pred_check_branch
          %367 = sbr.rel (%p365) target = $region52
        $region51: #{tpu_custom_call.1} parent=47 // pred_region
          %s368 = sand.u32 %s98, 1
          %s369 = scalar_lea.sflag [#allocation4], %s368
          %s370 = sand.u32 %s98, 1
          %s371 = smul.addr %s370, 16
          %s372 = scalar_lea.vmem [#allocation7], %s371
          %373 = dma.done %s369, 256
        $region52: #{tpu_custom_call.1} parent=47 // pred_fallthru
          _
      $region48: #{tpu_custom_call.1} parent=5 // pred_fallthru
        _
    $region6: #{tpu_custom_call.1} parent=1 // loop_footer
      %s20 = sadd.s32 1, %s16
    $region7: #{tpu_custom_call.1} parent=1 // loop_footer_branch
      %15 = sbr.rel target = $region3
    $region8: #{tpu_custom_call.1} parent=1 // loop_exit
      _
    %374 = vsyncpa [#allocation3], 1
    %s375 = scalar_lea.sflag [#allocation3], 1
    %376 = vsyncpa %s375, 1
    %377 = vsyncpa [#allocation6], 1
    %378 = vsyncpa [#allocation4], 1
    %s379 = scalar_lea.sflag [#allocation4], 1
    %380 = vsyncpa %s379, 1

</llo_original>
